<compile_context>
chip_gen: v7x
topology: tpu7x:2x2x1
jax: 0.10.0
libtpu: 0.0.40
codegen_flags: <defaults>
</compile_context>

<pallas_src>
import jax
import jax.numpy as jnp
from jax.experimental import pallas as pl
from jax.experimental.pallas import tpu as pltpu


def _identity_kernel(x_ref, o_ref):
    # Straight VMEM tile copy (identity). Output HBM buffer aliases the input.
    o_ref[...] = x_ref[...]


# Lane-dense candidates for the flattened last dimension (multiples of 128).
_LANE_CANDIDATES = (2048, 1024, 512, 256, 128)
# Per-block byte budget: in + out, each double-buffered => ~4x this resident.
# 2 MiB keeps us well inside v5e's 16 MiB / v7x's 32 MiB scoped VMEM.
_BLOCK_BYTE_BUDGET = 2 * 1024 * 1024


def _lane_dense_2d_shape(total):
    """Pick (rows, cols) with cols a large multiple of 128 when possible."""
    for cols in _LANE_CANDIDATES:
        if total >= cols and total % cols == 0:
            return total // cols, cols
    # Ragged / tiny fallback: single full-extent block (always layout-legal).
    return 1, max(total, 1)


def _identity_copy(x):
    """Identity via a tiled, aliased Pallas copy kernel."""
    orig_shape = x.shape
    total = 1
    for d in orig_shape:
        total *= d

    rows, cols = _lane_dense_2d_shape(total)
    x2d = x.reshape(rows, cols)
    itemsize = jnp.dtype(x2d.dtype).itemsize

    # Row-tile: biggest multiple of 8 that fits the byte budget; fall back to
    # the full extent (always legal) for small row counts.
    cap_rows = max(8, (_BLOCK_BYTE_BUDGET // max(cols * itemsize, 1)) // 8 * 8)
    if rows <= cap_rows or rows < 8:
        tr = rows
    else:
        tr = min(cap_rows, (rows // 8) * 8)
    grid = (pl.cdiv(rows, tr),)

    y2d = pl.pallas_call(
        _identity_kernel,
        out_shape=jax.ShapeDtypeStruct((rows, cols), x2d.dtype),
        grid=grid,
        in_specs=[pl.BlockSpec((tr, cols), lambda i: (i, 0))],
        out_specs=pl.BlockSpec((tr, cols), lambda i: (i, 0)),
        # Output aliases the input buffer: no extra HBM allocation / round trip
        # when the caller can donate (under jit); still correct eagerly.
        input_output_aliases={0: 0},
        compiler_params=pltpu.CompilerParams(
            dimension_semantics=("parallel",),
            vmem_limit_bytes=32 * 1024 * 1024,
        ),
        cost_estimate=pl.CostEstimate(
            flops=0,
            transcendentals=0,
            bytes_accessed=2 * total * itemsize,
        ),
    )(x2d)
    return y2d.reshape(orig_shape)


class PrintLayer:
    """JAX/Pallas equivalent of the PyTorch PrintLayer (identity + host print)."""

    def __init__(self, name):
        self.name = name

    def __call__(self, x):
        # Host-side print, matching PyTorch's `print(name, ' : ', x.shape)`.
        # TODO(synk): under jax.jit this prints once at trace time; use
        # jax.debug.print if per-call printing inside jit is required.
        print(self.name, " : ", tuple(x.shape))
        return _identity_copy(x)


if __name__ == "__main__":
    key = jax.random.PRNGKey(0)
    # Small NCHW-style activation consistent with a typical conv-net layer.
    x = jax.random.normal(key, (2, 4, 16, 16), dtype=jnp.float32)
    x_host = jax.device_get(x)  # host snapshot (input may be aliased/donated)

    layer = PrintLayer("print_layer")
    y = layer(x)
    y = jax.block_until_ready(y)

    assert y.shape == x.shape and y.dtype == x.dtype
    assert bool(jnp.array_equal(y, jnp.asarray(x_host)))
    print("KERNEL_OK")
</pallas_src>

<mosaic_0001>
module attributes {stable_mosaic.version = 11 : i64} {
  func.func @_identity_kernel(%arg0: i32, %arg1: memref<1x2048xf32, #tpu.memory_space<vmem>>, %arg2: memref<1x2048xf32, #tpu.memory_space<vmem>>) attributes {dimension_semantics = [#tpu.dimension_semantics<parallel>], iteration_bounds = array<i64: 1>, scalar_prefetch = 0 : i64, scratch_operands = 0 : i64, tpu.core_type = #tpu.core_type<tc>, window_params = [{transform_indices = @transform_0, window_bounds = array<i64: 1, 2048>}, {transform_indices = @transform_1, window_bounds = array<i64: 1, 2048>}]} {
    %c0 = arith.constant 0 : index
    %c0_0 = arith.constant 0 : index
    %0 = vector.load %arg1[%c0, %c0_0] : memref<1x2048xf32, #tpu.memory_space<vmem>>, vector<1x2048xf32>
    %c0_1 = arith.constant 0 : index
    %c0_2 = arith.constant 0 : index
    %1 = vector.load %arg2[%c0_1, %c0_2] : memref<1x2048xf32, #tpu.memory_space<vmem>>, vector<1x2048xf32>
    tpu.vector_store %arg2[%c0_1, %c0_2], %0 {strides = array<i32>} : memref<1x2048xf32, #tpu.memory_space<vmem>>, vector<1x2048xf32>,
    return
  }
  func.func @transform_0(%arg0: i32) -> (i32, i32) {
    %c0_i32 = arith.constant 0 : i32
    %c0_i32_0 = arith.constant 0 : i32
    return %arg0, %c0_i32 : i32, i32
  }
  func.func @transform_1(%arg0: i32) -> (i32, i32) {
    %c0_i32 = arith.constant 0 : i32
    %c0_i32_0 = arith.constant 0 : i32
    return %arg0, %c0_i32 : i32, i32
  }
}

</mosaic_0001>

<llo_original>
// kernel: tpu_custom_call.1
$region0: #{tpu_custom_call.1}
  #allocation0 [shape = 'u32[]', space=smem, size = 0x4, offset = 0x4, fixed_abs, tag = 'smem constant byte address 0x4 - core index']
  #allocation1 [shape = 'u32[144,128]{1,0:T(1,128)}', space=vmem, size = 0x12000, scoped, tag = 'internal scratch']
  %s0 = inlined_call_operand.hbm [shape: f32[1,2048], index: 0, kind: input, shape index: {}, may-alias: {0,1}]
  %s1 = inlined_call_operand.hbm [shape: f32[1,2048], index: 1, kind: output, shape index: {}, may-alias: {0,1}]
  %s2 = sld [smem:[#allocation0]]
  $region18: #{tpu_custom_call.1} parent=0
    _
  %s4 = ssub.s32 1, %s2
  %s5 = scalar_select 0, %s4, %s2
  $region1: #{tpu_custom_call.1} parent=0
    #allocation2 [shape = 'u8[8192]{0}', space=vmem, size = 0x2000, scoped, tag = 'input window, operand 0, single buffered']
    #allocation3 [shape = 's32[1]{0}', space=sflag, size = 0x4, scoped, tag = 'scoped memory for tpu_custom_call.1']
    #allocation4 [shape = 's32[1]{0}', space=sflag, size = 0x4, scoped, tag = 'scoped memory for tpu_custom_call.1']
    #allocation5 [shape = 'u8[8192]{0}', space=vmem, size = 0x2000, scoped, tag = 'output window, operand 0, single buffered']
    %6 = vsyncpa [#allocation3], 0
    %7 = vsyncpa [#allocation4], 0
    // Predicated region
    $region2: #{tpu_custom_call.1} parent=1 // pred_check
      _
    $region3: #{tpu_custom_call.1} parent=1 // pred_check_branch
      %9 = sbr.rel (0) target = $region5
    $region4: #{tpu_custom_call.1} parent=1 // pred_region
      %s11 = ssub.s32 256, 256
      %12 = vsyncadd [#allocation3], %s11
      %s14 = sshll.u32 [#allocation2], 4
      %s15 = int_to_ptr.vmem [resolvable:$true] %s14
      %17 = dma.hbm_to_vmem [thread:$0]  %s0, 256, %s15, [#allocation3]
    $region5: #{tpu_custom_call.1} parent=1 // pred_fallthru
      _
    // Predicated region
    $region6: #{tpu_custom_call.1} parent=1 // pred_check
      _
    $region7: #{tpu_custom_call.1} parent=1 // pred_check_branch
      %19 = sbr.rel (0) target = $region9
    $region8: #{tpu_custom_call.1} parent=1 // pred_region
      %20 = dma.done [#allocation3], 256
    $region9: #{tpu_custom_call.1} parent=1 // pred_fallthru
      _
    %v21 = vld [vmem:[#allocation2] sm:$0xff]
    %v22 = vld [vmem:[#allocation2 + $0x8] sm:$0xff]
    %23 = vst [vmem:[#allocation5] sm:$0xff] %v21
    %24 = vst [vmem:[#allocation5 + $0x8] sm:$0xff] %v22
    // Predicated region
    $region10: #{tpu_custom_call.1} parent=1 // pred_check
      _
    $region11: #{tpu_custom_call.1} parent=1 // pred_check_branch
      %26 = sbr.rel (0) target = $region13
    $region12: #{tpu_custom_call.1} parent=1 // pred_region
      %s28 = ssub.s32 256, 256
      %29 = vsyncadd [#allocation4], %s28
      %s31 = sshll.u32 [#allocation5], 4
      %s32 = int_to_ptr.vmem [resolvable:$true] %s31
      %34 = dma.vmem_to_hbm [thread:$0]  %s32, 256, %s1, [#allocation4]
    $region13: #{tpu_custom_call.1} parent=1 // pred_fallthru
      _
    // Predicated region
    $region14: #{tpu_custom_call.1} parent=1 // pred_check
      _
    $region15: #{tpu_custom_call.1} parent=1 // pred_check_branch
      %36 = sbr.rel (0) target = $region17
    $region16: #{tpu_custom_call.1} parent=1 // pred_region
      %37 = dma.done [#allocation4], 256
    $region17: #{tpu_custom_call.1} parent=1 // pred_fallthru
      _
    %38 = vsyncpa [#allocation3], 1
    %39 = vsyncpa [#allocation4], 1

</llo_original>
